<compile_context>
chip_gen: v7x
topology: tpu7x:2x2x1
jax: 0.10.0
libtpu: 0.0.40
codegen_flags: <defaults>
</compile_context>

<pallas_src>
import jax
import jax.numpy as jnp
from jax.experimental import pallas as pl
from jax.experimental.pallas import tpu as pltpu

_HID = 50        # true hidden width of LinearEncoder (cell_hidden_)
_HID_PAD = 128   # lane-dense padded hidden width stored by the kernel


def _ae_kernel(x_ref,
               w1_ref, b1_ref, w2_ref, b2_ref, w3_ref, b3_ref,
               wd_ref, bd_ref,
               out_ref, hid_ref):
    """Whole (folded) MLP chain for one batch tile, in VMEM on the MXU/VPU."""
    x = x_ref[...]  # already in the MXU dtype (bf16 or f32); no extra cast pass

    # --- encoder: (Linear -> ReLU) x3, f32 accumulation / f32 bias+ReLU ---
    h = jnp.dot(x, w1_ref[...], preferred_element_type=jnp.float32) + b1_ref[...]
    h = jnp.maximum(h, 0.0)
    h = jnp.dot(h.astype(w2_ref.dtype), w2_ref[...],
                preferred_element_type=jnp.float32) + b2_ref[...]
    h = jnp.maximum(h, 0.0)
    h = jnp.dot(h.astype(w3_ref.dtype), w3_ref[...],
                preferred_element_type=jnp.float32) + b3_ref[...]
    h = jnp.maximum(h, 0.0)                      # (tile, 128): cols 50.. are exactly 0
    hid_ref[...] = h.astype(hid_ref.dtype)       # lane-dense (128-wide) store

    # --- decoder: single folded matmul (wd = wd1 @ wd2, bd = bd1 @ wd2 + bd2) ---
    d = jnp.dot(h.astype(wd_ref.dtype), wd_ref[...],
                preferred_element_type=jnp.float32) + bd_ref[...]
    out_ref[...] = d.astype(out_ref.dtype)       # lane-dense (Dp multiple of 128)


def _round_up(x, m):
    return -(-x // m) * m


def _pick_batch_tile(batch, max_tile):
    """Whole batch for tiny inputs (single grid step); otherwise a large tile
    that still leaves >= 2 grid steps so v7x's two TensorCores both get work."""
    if batch <= 16:
        return batch                                   # grid of 1; block == full array
    if batch <= max_tile:
        return min(_round_up(-(-batch // 2), 8), max_tile)
    return max_tile


def multidcp_ae_autoencoder(input_cell_gex, params, *, batch_tile=256,
                            use_bf16=True):
    """Pallas forward for MultiDCP_AE.autoencoder (inference).

    GaussianNoise only acts in training mode -> identity here.
    Returns (out, cell_hidden_) with shapes (B, cell_decoder_dim) and (B, 50).
    batch_tile: ~128 on v5e, 256-512 on v6e/v7x.
    """
    x = jnp.asarray(input_cell_gex, jnp.float32)
    B, G = x.shape

    # ---- offline weight preparation (pure XLA, runs once) -------------------
    # Fold the two decoder linears (no nonlinearity between them):
    #   (h @ wd1 + bd1) @ wd2 + bd2 == h @ (wd1 @ wd2) + (bd1 @ wd2 + bd2)
    wd = params["wd1"] @ params["wd2"]                   # [50, D]
    bd = params["bd1"] @ params["wd2"] + params["bd2"]   # [1, D]
    D = wd.shape[1]

    # Pad the 50-wide hidden layer and the decoder output width to multiples of
    # 128 (zero padding => numerically exact), so kernel stores are unmasked.
    Dp = _round_up(D, 128)
    w3p = jnp.pad(params["w3"], ((0, 0), (0, _HID_PAD - _HID)))
    b3p = jnp.pad(params["b3"], ((0, 0), (0, _HID_PAD - _HID)))
    wdp = jnp.pad(wd, ((0, _HID_PAD - _HID), (0, Dp - D)))
    bdp = jnp.pad(bd, ((0, 0), (0, Dp - D)))

    mxu_dtype = jnp.bfloat16 if use_bf16 else jnp.float32
    # MXU operands in bf16; biases stay f32 (added to the f32 accumulator).
    w1 = params["w1"].astype(mxu_dtype)
    w2 = params["w2"].astype(mxu_dtype)
    w3p = w3p.astype(mxu_dtype)
    wdp = wdp.astype(mxu_dtype)
    b1 = params["b1"].astype(jnp.float32)
    b2 = params["b2"].astype(jnp.float32)
    b3p = b3p.astype(jnp.float32)
    bdp = bdp.astype(jnp.float32)

    # ---- batch tiling --------------------------------------------------------
    tile = _pick_batch_tile(B, batch_tile)
    Bp = _round_up(B, tile)
    if Bp != B:
        x = jnp.pad(x, ((0, Bp - B), (0, 0)))
    x = x.astype(mxu_dtype)
    grid = (Bp // tile,)

    weight_args = [w1, b1, w2, b2, w3p, b3p, wdp, bdp]

    def _full_block(arr):
        # Loop-invariant block: same (0, 0) block every grid step, so Pallas
        # keeps it resident and does not re-issue the DMA.
        return pl.BlockSpec(arr.shape, lambda i: (0, 0))

    in_specs = [pl.BlockSpec((tile, G), lambda i: (i, 0))]
    in_specs += [_full_block(a) for a in weight_args]
    out_specs = [
        pl.BlockSpec((tile, Dp), lambda i: (i, 0)),        # decoder output
        pl.BlockSpec((tile, _HID_PAD), lambda i: (i, 0)),  # padded cell_hidden_
    ]

    # ---- explicit VMEM budget + cost hint ------------------------------------
    itemsize = jnp.dtype(mxu_dtype).itemsize
    weight_bytes = int(sum(a.size * a.dtype.itemsize for a in weight_args))
    vmem_est = (2 * tile * G * itemsize              # double-buffered input tile
                + 2 * tile * (Dp + _HID_PAD) * 4     # double-buffered output tiles
                + 2 * weight_bytes)                  # weight pipeline buffers
    # floor at the usual scoped default, cap at 48 MiB for v7x's 64 MiB VMEM
    vmem_limit = int(min(max(2 * vmem_est + (4 << 20), 32 << 20), 48 << 20))

    flops = 2 * Bp * (G * 200 + 200 * 100 + 100 * _HID_PAD + _HID_PAD * Dp)
    bytes_accessed = (Bp * G * itemsize + weight_bytes
                      + Bp * (Dp + _HID_PAD) * 4)
    cost = pl.CostEstimate(flops=flops, transcendentals=0,
                           bytes_accessed=bytes_accessed)

    out_p, hid_p = pl.pallas_call(
        _ae_kernel,
        out_shape=(
            jax.ShapeDtypeStruct((Bp, Dp), jnp.float32),
            jax.ShapeDtypeStruct((Bp, _HID_PAD), jnp.float32),
        ),
        grid_spec=pltpu.PrefetchScalarGridSpec(
            num_scalar_prefetch=0,
            grid=grid,
            in_specs=in_specs,
            out_specs=out_specs,
        ),
        compiler_params=pltpu.CompilerParams(
            dimension_semantics=("parallel",),
            vmem_limit_bytes=vmem_limit,
        ),
        cost_estimate=cost,
    )(x, *weight_args)

    # Strip batch / lane padding (cheap XLA slices outside the kernel).
    return out_p[:B, :D], hid_p[:B, :_HID]


def init_params(key, cell_id_input_dim, cell_decoder_dim):
    """Deterministic synthetic parameters (shapes match MultiDCP_AE.__init__)."""
    dims = [
        ("w1", cell_id_input_dim, 200),   # LinearEncoder.cell_id_1
        ("w2", 200, 100),                 # LinearEncoder.cell_id_2
        ("w3", 100, 50),                  # LinearEncoder.cell_id_3
        ("wd1", 50, 200),                 # decoder_linear[0]
        ("wd2", 200, cell_decoder_dim),   # decoder_linear[1]
    ]
    params = {}
    for name, fan_in, fan_out in dims:
        key, kw, kb = jax.random.split(key, 3)
        bound = 1.0 / (fan_in ** 0.5)
        params[name] = jax.random.uniform(
            kw, (fan_in, fan_out), jnp.float32, -bound, bound)
        params["b" + name[1:]] = jax.random.uniform(
            kb, (1, fan_out), jnp.float32, -bound, bound)
    return params


def reference_forward(x, p):
    """Pure-JAX f32 reference with the original (unfolded) module semantics."""
    h = jax.nn.relu(x @ p["w1"] + p["b1"])
    h = jax.nn.relu(h @ p["w2"] + p["b2"])
    h = jax.nn.relu(h @ p["w3"] + p["b3"])
    d = h @ p["wd1"] + p["bd1"]
    d = d @ p["wd2"] + p["bd2"]
    return d, h


if __name__ == "__main__":
    key = jax.random.PRNGKey(0)
    k_x, k_p, k_x2 = jax.random.split(key, 3)

    cell_id_input_dim = 64     # gene-expression profile dim (small synthetic)
    cell_decoder_dim = 64      # decoder output dim (small synthetic)
    params = init_params(k_p, cell_id_input_dim, cell_decoder_dim)

    # bf16 MXU operands + folded decoder vs. pure-f32 reference => relaxed tol.
    ATOL = RTOL = 3e-2

    # --- tiny batch: collapses to a single grid step --------------------------
    x_small = jax.random.normal(k_x, (8, cell_id_input_dim), dtype=jnp.float32)
    out, hid = multidcp_ae_autoencoder(x_small, params)
    out = jax.block_until_ready(out)
    hid = jax.block_until_ready(hid)
    ref_out, ref_hid = reference_forward(x_small, params)
    assert out.shape == (8, cell_decoder_dim)
    assert hid.shape == (8, 50)
    assert jnp.allclose(out, ref_out, atol=ATOL, rtol=RTOL)
    assert jnp.allclose(hid, ref_hid, atol=ATOL, rtol=RTOL)

    # --- non-divisible batch: exercises batch padding + a 2-step parallel grid
    x_big = jax.random.normal(k_x2, (24, cell_id_input_dim), dtype=jnp.float32)
    out2, hid2 = multidcp_ae_autoencoder(x_big, params)
    out2 = jax.block_until_ready(out2)
    hid2 = jax.block_until_ready(hid2)
    ref_out2, ref_hid2 = reference_forward(x_big, params)
    assert out2.shape == (24, cell_decoder_dim)
    assert hid2.shape == (24, 50)
    assert jnp.allclose(out2, ref_out2, atol=ATOL, rtol=RTOL)
    assert jnp.allclose(hid2, ref_hid2, atol=ATOL, rtol=RTOL)

    print("KERNEL_OK")
</pallas_src>

<mosaic_0001>
module attributes {stable_mosaic.version = 11 : i64} {
  func.func @_ae_kernel(%arg0: i32, %arg1: memref<8x64xbf16, #tpu.memory_space<vmem>>, %arg2: memref<64x200xbf16, #tpu.memory_space<vmem>>, %arg3: memref<1x200xf32, #tpu.memory_space<vmem>>, %arg4: memref<200x100xbf16, #tpu.memory_space<vmem>>, %arg5: memref<1x100xf32, #tpu.memory_space<vmem>>, %arg6: memref<100x128xbf16, #tpu.memory_space<vmem>>, %arg7: memref<1x128xf32, #tpu.memory_space<vmem>>, %arg8: memref<128x128xbf16, #tpu.memory_space<vmem>>, %arg9: memref<1x128xf32, #tpu.memory_space<vmem>>, %arg10: memref<8x128xf32, #tpu.memory_space<vmem>>, %arg11: memref<8x128xf32, #tpu.memory_space<vmem>>) attributes {dimension_semantics = [#tpu.dimension_semantics<parallel>], iteration_bounds = array<i64: 1>, scalar_prefetch = 0 : i64, scratch_operands = 0 : i64, tpu.core_type = #tpu.core_type<tc>, window_params = [{transform_indices = @transform_0, window_bounds = array<i64: 8, 64>}, {pipeline_mode = #tpu.pipeline_mode<synchronous>, transform_indices = @transform_1, window_bounds = array<i64: 64, 200>}, {pipeline_mode = #tpu.pipeline_mode<synchronous>, transform_indices = @transform_2, window_bounds = array<i64: 1, 200>}, {pipeline_mode = #tpu.pipeline_mode<synchronous>, transform_indices = @transform_3, window_bounds = array<i64: 200, 100>}, {pipeline_mode = #tpu.pipeline_mode<synchronous>, transform_indices = @transform_4, window_bounds = array<i64: 1, 100>}, {pipeline_mode = #tpu.pipeline_mode<synchronous>, transform_indices = @transform_5, window_bounds = array<i64: 100, 128>}, {pipeline_mode = #tpu.pipeline_mode<synchronous>, transform_indices = @transform_6, window_bounds = array<i64: 1, 128>}, {pipeline_mode = #tpu.pipeline_mode<synchronous>, transform_indices = @transform_7, window_bounds = array<i64: 128, 128>}, {pipeline_mode = #tpu.pipeline_mode<synchronous>, transform_indices = @transform_8, window_bounds = array<i64: 1, 128>}, {transform_indices = @transform_9, window_bounds = array<i64: 8, 128>}, {transform_indices = @transform_10, window_bounds = array<i64: 8, 128>}]} {
    %c0 = arith.constant 0 : index
    %c0_0 = arith.constant 0 : index
    %0 = vector.load %arg1[%c0, %c0_0] : memref<8x64xbf16, #tpu.memory_space<vmem>>, vector<8x64xbf16>
    %c0_1 = arith.constant 0 : index
    %c0_2 = arith.constant 0 : index
    %1 = vector.load %arg2[%c0_1, %c0_2] : memref<64x200xbf16, #tpu.memory_space<vmem>>, vector<64x200xbf16>
    %cst = arith.constant dense<0.000000e+00> : vector<8x200xf32>
    %2 = tpu.matmul %0, %1, %cst {dimension_numbers = #tpu.dot_dimension_numbers<[1], [0], [0], [1], [0, 0, 1, 1], [], []>} : vector<8x64xbf16>, vector<64x200xbf16>, vector<8x200xf32> -> vector<8x200xf32>
    %c0_3 = arith.constant 0 : index
    %c0_4 = arith.constant 0 : index
    %3 = vector.load %arg3[%c0_3, %c0_4] : memref<1x200xf32, #tpu.memory_space<vmem>>, vector<1x200xf32>
    %4 = vector.broadcast %3 : vector<1x200xf32> to vector<8x200xf32>
    %5 = arith.addf %2, %4 : vector<8x200xf32>
    %cst_5 = arith.constant 0.000000e+00 : f32
    %6 = vector.broadcast %cst_5 : f32 to vector<8x200xf32>
    %7 = arith.maximumf %5, %6 : vector<8x200xf32>
    %8 = arith.truncf %7 : vector<8x200xf32> to vector<8x200xbf16>
    %c0_6 = arith.constant 0 : index
    %c0_7 = arith.constant 0 : index
    %9 = vector.load %arg4[%c0_6, %c0_7] : memref<200x100xbf16, #tpu.memory_space<vmem>>, vector<200x100xbf16>
    %cst_8 = arith.constant dense<0.000000e+00> : vector<8x100xf32>
    %10 = tpu.matmul %8, %9, %cst_8 {dimension_numbers = #tpu.dot_dimension_numbers<[1], [0], [0], [1], [0, 0, 1, 1], [], []>} : vector<8x200xbf16>, vector<200x100xbf16>, vector<8x100xf32> -> vector<8x100xf32>
    %c0_9 = arith.constant 0 : index
    %c0_10 = arith.constant 0 : index
    %11 = vector.load %arg5[%c0_9, %c0_10] : memref<1x100xf32, #tpu.memory_space<vmem>>, vector<1x100xf32>
    %12 = vector.broadcast %11 : vector<1x100xf32> to vector<8x100xf32>
    %13 = arith.addf %10, %12 : vector<8x100xf32>
    %cst_11 = arith.constant 0.000000e+00 : f32
    %14 = vector.broadcast %cst_11 : f32 to vector<8x100xf32>
    %15 = arith.maximumf %13, %14 : vector<8x100xf32>
    %16 = arith.truncf %15 : vector<8x100xf32> to vector<8x100xbf16>
    %c0_12 = arith.constant 0 : index
    %c0_13 = arith.constant 0 : index
    %17 = vector.load %arg6[%c0_12, %c0_13] : memref<100x128xbf16, #tpu.memory_space<vmem>>, vector<100x128xbf16>
    %cst_14 = arith.constant dense<0.000000e+00> : vector<8x128xf32>
    %18 = tpu.matmul %16, %17, %cst_14 {dimension_numbers = #tpu.dot_dimension_numbers<[1], [0], [0], [1], [0, 0, 1, 1], [], []>} : vector<8x100xbf16>, vector<100x128xbf16>, vector<8x128xf32> -> vector<8x128xf32>
    %c0_15 = arith.constant 0 : index
    %c0_16 = arith.constant 0 : index
    %19 = vector.load %arg7[%c0_15, %c0_16] : memref<1x128xf32, #tpu.memory_space<vmem>>, vector<1x128xf32>
    %20 = vector.broadcast %19 : vector<1x128xf32> to vector<8x128xf32>
    %21 = arith.addf %18, %20 : vector<8x128xf32>
    %cst_17 = arith.constant 0.000000e+00 : f32
    %22 = vector.broadcast %cst_17 : f32 to vector<8x128xf32>
    %23 = arith.maximumf %21, %22 : vector<8x128xf32>
    %c0_18 = arith.constant 0 : index
    %c0_19 = arith.constant 0 : index
    %24 = vector.load %arg11[%c0_18, %c0_19] : memref<8x128xf32, #tpu.memory_space<vmem>>, vector<8x128xf32>
    tpu.vector_store %arg11[%c0_18, %c0_19], %23 {strides = array<i32>} : memref<8x128xf32, #tpu.memory_space<vmem>>, vector<8x128xf32>,
    %25 = arith.truncf %23 : vector<8x128xf32> to vector<8x128xbf16>
    %c0_20 = arith.constant 0 : index
    %c0_21 = arith.constant 0 : index
    %26 = vector.load %arg8[%c0_20, %c0_21] : memref<128x128xbf16, #tpu.memory_space<vmem>>, vector<128x128xbf16>
    %cst_22 = arith.constant dense<0.000000e+00> : vector<8x128xf32>
    %27 = tpu.matmul %25, %26, %cst_22 {dimension_numbers = #tpu.dot_dimension_numbers<[1], [0], [0], [1], [0, 0, 1, 1], [], []>} : vector<8x128xbf16>, vector<128x128xbf16>, vector<8x128xf32> -> vector<8x128xf32>
    %c0_23 = arith.constant 0 : index
    %c0_24 = arith.constant 0 : index
    %28 = vector.load %arg9[%c0_23, %c0_24] : memref<1x128xf32, #tpu.memory_space<vmem>>, vector<1x128xf32>
    %29 = vector.broadcast %28 : vector<1x128xf32> to vector<8x128xf32>
    %30 = arith.addf %27, %29 : vector<8x128xf32>
    %c0_25 = arith.constant 0 : index
    %c0_26 = arith.constant 0 : index
    %31 = vector.load %arg10[%c0_25, %c0_26] : memref<8x128xf32, #tpu.memory_space<vmem>>, vector<8x128xf32>
    tpu.vector_store %arg10[%c0_25, %c0_26], %30 {strides = array<i32>} : memref<8x128xf32, #tpu.memory_space<vmem>>, vector<8x128xf32>,
    return
  }
  func.func @transform_0(%arg0: i32) -> (i32, i32) {
    %c0_i32 = arith.constant 0 : i32
    %c0_i32_0 = arith.constant 0 : i32
    return %arg0, %c0_i32 : i32, i32
  }
  func.func @transform_1(%arg0: i32) -> (i32, i32) {
    %c0_i32 = arith.constant 0 : i32
    %c0_i32_0 = arith.constant 0 : i32
    %c0_i32_1 = arith.constant 0 : i32
    return %c0_i32, %c0_i32_0 : i32, i32
  }
  func.func @transform_2(%arg0: i32) -> (i32, i32) {
    %c0_i32 = arith.constant 0 : i32
    %c0_i32_0 = arith.constant 0 : i32
    %c0_i32_1 = arith.constant 0 : i32
    return %c0_i32, %c0_i32_0 : i32, i32
  }
  func.func @transform_3(%arg0: i32) -> (i32, i32) {
    %c0_i32 = arith.constant 0 : i32
    %c0_i32_0 = arith.constant 0 : i32
    %c0_i32_1 = arith.constant 0 : i32
    return %c0_i32, %c0_i32_0 : i32, i32
  }
  func.func @transform_4(%arg0: i32) -> (i32, i32) {
    %c0_i32 = arith.constant 0 : i32
    %c0_i32_0 = arith.constant 0 : i32
    %c0_i32_1 = arith.constant 0 : i32
    return %c0_i32, %c0_i32_0 : i32, i32
  }
  func.func @transform_5(%arg0: i32) -> (i32, i32) {
    %c0_i32 = arith.constant 0 : i32
    %c0_i32_0 = arith.constant 0 : i32
    %c0_i32_1 = arith.constant 0 : i32
    return %c0_i32, %c0_i32_0 : i32, i32
  }
  func.func @transform_6(%arg0: i32) -> (i32, i32) {
    %c0_i32 = arith.constant 0 : i32
    %c0_i32_0 = arith.constant 0 : i32
    %c0_i32_1 = arith.constant 0 : i32
    return %c0_i32, %c0_i32_0 : i32, i32
  }
  func.func @transform_7(%arg0: i32) -> (i32, i32) {
    %c0_i32 = arith.constant 0 : i32
    %c0_i32_0 = arith.constant 0 : i32
    %c0_i32_1 = arith.constant 0 : i32
    return %c0_i32, %c0_i32_0 : i32, i32
  }
  func.func @transform_8(%arg0: i32) -> (i32, i32) {
    %c0_i32 = arith.constant 0 : i32
    %c0_i32_0 = arith.constant 0 : i32
    %c0_i32_1 = arith.constant 0 : i32
    return %c0_i32, %c0_i32_0 : i32, i32
  }
  func.func @transform_9(%arg0: i32) -> (i32, i32) {
    %c0_i32 = arith.constant 0 : i32
    %c0_i32_0 = arith.constant 0 : i32
    return %arg0, %c0_i32 : i32, i32
  }
  func.func @transform_10(%arg0: i32) -> (i32, i32) {
    %c0_i32 = arith.constant 0 : i32
    %c0_i32_0 = arith.constant 0 : i32
    return %arg0, %c0_i32 : i32, i32
  }
}

</mosaic_0001>

<llo_original>
// kernel: tpu_custom_call.1
$region0: #{tpu_custom_call.1}
  #allocation0 [shape = 'u32[]', space=smem, size = 0x4, offset = 0x4, fixed_abs, tag = 'smem constant byte address 0x4 - core index']
  #allocation1 [shape = 'u32[144,128]{1,0:T(1,128)}', space=vmem, size = 0x12000, scoped, tag = 'internal scratch']
  %s0 = inlined_call_operand.hbm [shape: bf16[8,64], index: 0, kind: input, shape index: {}]
  %s1 = inlined_call_operand.hbm [shape: bf16[64,200], index: 1, kind: input, shape index: {}]
  %s2 = inlined_call_operand.vmem [shape: f32[1,200], index: 2, kind: input, shape index: {}]
  %s3 = inlined_call_operand.hbm [shape: bf16[200,100], index: 3, kind: input, shape index: {}]
  %s4 = inlined_call_operand.vmem [shape: f32[1,100], index: 4, kind: input, shape index: {}]
  %s5 = inlined_call_operand.hbm [shape: bf16[100,128], index: 5, kind: input, shape index: {}]
  %s6 = inlined_call_operand.vmem [shape: f32[1,128], index: 6, kind: input, shape index: {}]
  %s7 = inlined_call_operand.hbm [shape: bf16[128,128], index: 7, kind: input, shape index: {}]
  %s8 = inlined_call_operand.vmem [shape: f32[1,128], index: 8, kind: input, shape index: {}]
  %s9 = inlined_call_operand.hbm [shape: f32[8,128], index: 9, kind: output, shape index: {0}]
  %s10 = inlined_call_operand.hbm [shape: f32[8,128], index: 10, kind: output, shape index: {1}]
  %11 = xla_tuple %s9, %s10
  %s12 = sld [smem:[#allocation0]]
  $region74: #{tpu_custom_call.1} parent=0
    _
  %s14 = ssub.s32 1, %s12
  %s15 = scalar_select 0, %s14, %s12
  $region1: #{tpu_custom_call.1} parent=0
    #allocation2 [shape = 'u8[2048]{0}', space=vmem, size = 0x800, scoped, tag = 'input window, operand 0, single buffered']
    #allocation3 [shape = 's32[1]{0}', space=sflag, size = 0x4, scoped, tag = 'scoped memory for tpu_custom_call.1']
    #allocation4 [shape = 's32[1]{0}', space=sflag, size = 0x4, scoped, tag = 'scoped memory for tpu_custom_call.1']
    #allocation5 [shape = 'u8[32768]{0}', space=vmem, size = 0x8000, scoped, tag = 'input window, operand 1, single buffered']
    #allocation6 [shape = 's32[1]{0}', space=sflag, size = 0x4, scoped, tag = 'scoped memory for tpu_custom_call.1']
    #allocation7 [shape = 'u8[51200]{0}', space=vmem, size = 0xc800, scoped, tag = 'input window, operand 3, single buffered']
    #allocation8 [shape = 'u8[26624]{0}', space=vmem, size = 0x6800, scoped, tag = 'input window, operand 5, single buffered']
    #allocation9 [shape = 's32[1]{0}', space=sflag, size = 0x4, scoped, tag = 'scoped memory for tpu_custom_call.1']
    #allocation10 [shape = 'u8[32768]{0}', space=vmem, size = 0x8000, scoped, tag = 'input window, operand 7, single buffered']
    #allocation11 [shape = 'u8[4096]{0}', space=vmem, size = 0x1000, scoped, tag = 'output window, operand 0, single buffered']
    #allocation12 [shape = 'u8[4096]{0}', space=vmem, size = 0x1000, scoped, tag = 'output window, operand 1, single buffered']
    #allocation13 [shape = 's32[1]{0}', space=sflag, size = 0x4, scoped, tag = 'scoped memory for tpu_custom_call.1']
    %16 = vsyncpa [#allocation3], 0
    %17 = vsyncpa [#allocation6], 0
    %18 = vsyncpa [#allocation9], 0
    %19 = vsyncpa [#allocation4], 0
    %20 = vsyncpa [#allocation13], 0
    // Predicated region
    $region2: #{tpu_custom_call.1} parent=1 // pred_check
      _
    $region3: #{tpu_custom_call.1} parent=1 // pred_check_branch
      %22 = sbr.rel (0) target = $region5
    $region4: #{tpu_custom_call.1} parent=1 // pred_region
      %s24 = ssub.s32 64, 64
      %25 = vsyncadd [#allocation3], %s24
      %s27 = sshll.u32 [#allocation2], 4
      %s28 = int_to_ptr.vmem [resolvable:$true] %s27
      %30 = dma.hbm_to_vmem [thread:$0]  %s0, 64, %s28, [#allocation3]
    $region5: #{tpu_custom_call.1} parent=1 // pred_fallthru
      _
    // Predicated region
    $region6: #{tpu_custom_call.1} parent=1 // pred_check
      _
    $region7: #{tpu_custom_call.1} parent=1 // pred_check_branch
      %32 = sbr.rel (0) target = $region9
    $region8: #{tpu_custom_call.1} parent=1 // pred_region
      %s34 = ssub.s32 1024, 1024
      %35 = vsyncadd [#allocation6], %s34
      %s36 = sshll.u32 [#allocation5], 4
      %s37 = int_to_ptr.vmem [resolvable:$true] %s36
      %42 = dma.hbm_to_vmem [thread:$0]  %s1, 1024, %s37, [#allocation6], 128, 128, 8
    $region9: #{tpu_custom_call.1} parent=1 // pred_fallthru
      _
    // Predicated region
    $region10: #{tpu_custom_call.1} parent=1 // pred_check
      _
    $region11: #{tpu_custom_call.1} parent=1 // pred_check_branch
      %44 = sbr.rel (0) target = $region13
    $region12: #{tpu_custom_call.1} parent=1 // pred_region
      _
    $region13: #{tpu_custom_call.1} parent=1 // pred_fallthru
      _
    // Predicated region
    $region14: #{tpu_custom_call.1} parent=1 // pred_check
      _
    $region15: #{tpu_custom_call.1} parent=1 // pred_check_branch
      %46 = sbr.rel (0) target = $region17
    $region16: #{tpu_custom_call.1} parent=1 // pred_region
      %s48 = ssub.s32 1600, 1600
      %49 = vsyncadd [#allocation6], %s48
      %s50 = sshll.u32 [#allocation7], 4
      %s51 = int_to_ptr.vmem [resolvable:$true] %s50
      %56 = dma.hbm_to_vmem [thread:$0]  %s3, 1600, %s51, [#allocation6], 64, 64, 4
    $region17: #{tpu_custom_call.1} parent=1 // pred_fallthru
      _
    // Predicated region
    $region18: #{tpu_custom_call.1} parent=1 // pred_check
      _
    $region19: #{tpu_custom_call.1} parent=1 // pred_check_branch
      %58 = sbr.rel (0) target = $region21
    $region20: #{tpu_custom_call.1} parent=1 // pred_region
      _
    $region21: #{tpu_custom_call.1} parent=1 // pred_fallthru
      _
    // Predicated region
    $region22: #{tpu_custom_call.1} parent=1 // pred_check
      _
    $region23: #{tpu_custom_call.1} parent=1 // pred_check_branch
      %60 = sbr.rel (0) target = $region25
    $region24: #{tpu_custom_call.1} parent=1 // pred_region
      %s62 = ssub.s32 832, 832
      %63 = vsyncadd [#allocation9], %s62
      %s64 = sshll.u32 [#allocation8], 4
      %s65 = int_to_ptr.vmem [resolvable:$true] %s64
      %70 = dma.hbm_to_vmem [thread:$0]  %s5, 832, %s65, [#allocation9], 64, 64, 4
    $region25: #{tpu_custom_call.1} parent=1 // pred_fallthru
      _
    // Predicated region
    $region26: #{tpu_custom_call.1} parent=1 // pred_check
      _
    $region27: #{tpu_custom_call.1} parent=1 // pred_check_branch
      %72 = sbr.rel (0) target = $region29
    $region28: #{tpu_custom_call.1} parent=1 // pred_region
      _
    $region29: #{tpu_custom_call.1} parent=1 // pred_fallthru
      _
    // Predicated region
    $region30: #{tpu_custom_call.1} parent=1 // pred_check
      _
    $region31: #{tpu_custom_call.1} parent=1 // pred_check_branch
      %74 = sbr.rel (0) target = $region33
    $region32: #{tpu_custom_call.1} parent=1 // pred_region
      %s76 = ssub.s32 1024, 1024
      %77 = vsyncadd [#allocation9], %s76
      %s78 = sshll.u32 [#allocation10], 4
      %s79 = int_to_ptr.vmem [resolvable:$true] %s78
      %84 = dma.hbm_to_vmem [thread:$0]  %s7, 1024, %s79, [#allocation9], 64, 64, 4
    $region33: #{tpu_custom_call.1} parent=1 // pred_fallthru
      _
    // Predicated region
    $region34: #{tpu_custom_call.1} parent=1 // pred_check
      _
    $region35: #{tpu_custom_call.1} parent=1 // pred_check_branch
      %86 = sbr.rel (0) target = $region37
    $region36: #{tpu_custom_call.1} parent=1 // pred_region
      _
    $region37: #{tpu_custom_call.1} parent=1 // pred_fallthru
      _
    // Predicated region
    $region38: #{tpu_custom_call.1} parent=1 // pred_check
      _
    $region39: #{tpu_custom_call.1} parent=1 // pred_check_branch
      %88 = sbr.rel (0) target = $region41
    $region40: #{tpu_custom_call.1} parent=1 // pred_region
      %89 = dma.done [#allocation3], 64
    $region41: #{tpu_custom_call.1} parent=1 // pred_fallthru
      _
    // Predicated region
    $region42: #{tpu_custom_call.1} parent=1 // pred_check
      _
    $region43: #{tpu_custom_call.1} parent=1 // pred_check_branch
      %91 = sbr.rel (0) target = $region45
    $region44: #{tpu_custom_call.1} parent=1 // pred_region
      %92 = dma.done [#allocation6], 1024
    $region45: #{tpu_custom_call.1} parent=1 // pred_fallthru
      _
    // Predicated region
    $region46: #{tpu_custom_call.1} parent=1 // pred_check
      _
    $region47: #{tpu_custom_call.1} parent=1 // pred_check_branch
      %94 = sbr.rel (0) target = $region49
    $region48: #{tpu_custom_call.1} parent=1 // pred_region
      %95 = dma.done [#allocation6], 1600
    $region49: #{tpu_custom_call.1} parent=1 // pred_fallthru
      _
    // Predicated region
    $region50: #{tpu_custom_call.1} parent=1 // pred_check
      _
    $region51: #{tpu_custom_call.1} parent=1 // pred_check_branch
      %97 = sbr.rel (0) target = $region53
    $region52: #{tpu_custom_call.1} parent=1 // pred_region
      %98 = dma.done [#allocation9], 832
    $region53: #{tpu_custom_call.1} parent=1 // pred_fallthru
      _
    // Predicated region
    $region54: #{tpu_custom_call.1} parent=1 // pred_check
      _
    $region55: #{tpu_custom_call.1} parent=1 // pred_check_branch
      %100 = sbr.rel (0) target = $region57
    $region56: #{tpu_custom_call.1} parent=1 // pred_region
      %101 = dma.done [#allocation9], 1024
    $region57: #{tpu_custom_call.1} parent=1 // pred_fallthru
      _
    %v103 = vld [vmem:[#allocation2] sm:$0xf]
    %v104 = vld [vmem:[#allocation5] sm:$0xff]
    %v105 = vld [vmem:[#allocation5 + $0x8] sm:$0xff]
    %v106 = vld [vmem:[#allocation5 + $0x10] sm:$0xff]
    %v107 = vld [vmem:[#allocation5 + $0x18] sm:$0xff]
    %v108 = vld [vmem:[#allocation5 + $0x20] sm:$0xff]
    %v109 = vld [vmem:[#allocation5 + $0x28] sm:$0xff]
    %v110 = vld [vmem:[#allocation5 + $0x30] sm:$0xff]
    %v111 = vld [vmem:[#allocation5 + $0x38] sm:$0xff]
    %v112 = vld [vmem:[%s2] sm:$0x3]
    %v114 = vlaneseq
    %v115 = vshrl.u32 %v114, 7
    %v116 = vsub.s32 0, %v115
    %v117 = vrot.slane %v112, %v116
    %v118 = vlaneseq
    %v119 = vshrl.u32 %v118, 7
    %v120 = vsub.s32 1, %v119
    %v121 = vrot.slane %v112, %v120
    %v132 = vunpack.c.l.b16 %v104
    %v133 = vunpack.c.h.b16 %v104
    %v134 = vunpack.c.l.b16 %v105
    %v135 = vunpack.c.h.b16 %v105
    %v136 = vunpack.c.l.b16 %v106
    %v137 = vunpack.c.h.b16 %v106
    %v138 = vunpack.c.l.b16 %v107
    %v139 = vunpack.c.h.b16 %v107
    %v140 = vunpack.c.l.b16 %v108
    %v141 = vunpack.c.h.b16 %v108
    %v142 = vunpack.c.l.b16 %v109
    %v143 = vunpack.c.h.b16 %v109
    %v144 = vunpack.c.l.b16 %v110
    %v145 = vunpack.c.h.b16 %v110
    %v146 = vunpack.c.l.b16 %v111
    %v147 = vunpack.c.h.b16 %v111
    %v148 = vpack.c.b16 %v134, %v132
    %v149 = vpack.c.b16 %v135, %v133
    %v150 = vpack.c.b16 %v138, %v136
    %v151 = vpack.c.b16 %v139, %v137
    %v152 = vpack.c.b16 %v142, %v140
    %v153 = vpack.c.b16 %v143, %v141
    %v154 = vpack.c.b16 %v146, %v144
    %v155 = vpack.c.b16 %v147, %v145
    %vm164 = vcmask 523264
    %v166 = vsel %vm164, %v103, 0
    %168 = vmatprep.subr.bf16.mxu0 %v149
    %169 = vmatpush1.bf16.msra.mxu0 %v148
    %170 = vmatprep.subr.bf16.mxu0 %v151
    %171 = vmatpush1.bf16.msra.mxu0 %v150
    %172 = vmatprep.subr.bf16.mxu0 %v153
    %173 = vmatpush1.bf16.msra.mxu0 %v152
    %174 = vmatprep.subr.bf16.mxu0 %v155
    %175 = vmatpush1.bf16.msra.mxu0 %v154
    %176 = vmatprep.subr.bf16.mxu0 0
    %177 = vmatpush1.bf16.msra.mxu0 0
    %178 = vmatprep.subr.bf16.mxu0 0
    %179 = vmatpush1.bf16.msra.mxu0 0
    %180 = vmatprep.subr.bf16.mxu0 0
    %181 = vmatpush1.bf16.msra.mxu0 0
    %182 = vmatprep.subr.bf16.mxu0 0
    %183 = vmatpush1.bf16.msra.mxu0 0
    %184 = vmatprep.subr.bf16.mxu0 0
    %185 = vmatpush1.bf16.msra.mxu0 0
    %186 = vmatprep.subr.bf16.mxu0 0
    %187 = vmatpush1.bf16.msra.mxu0 0
    %188 = vmatprep.subr.bf16.mxu0 0
    %189 = vmatpush1.bf16.msra.mxu0 0
    %190 = vmatprep.subr.bf16.mxu0 0
    %191 = vmatpush1.bf16.msra.mxu0 0
    %192 = vmatprep.subr.bf16.mxu0 0
    %193 = vmatpush1.bf16.msra.mxu0 0
    %194 = vmatprep.subr.bf16.mxu0 0
    %195 = vmatpush1.bf16.msra.mxu0 0
    %196 = vmatprep.subr.bf16.mxu0 0
    %197 = vmatpush1.bf16.msra.mxu0 0
    %198 = vmatprep.subr.bf16.mxu0 0
    %199 = vmatpush1.bf16.msra.mxu0 0
    %200 = vmatprep.mubr.bf16.mxu0 0
    %201 = vmatmul.mubr.bf16.gmra.mrb[0].mxu0 %v166
    %v202 = vpop.f32.mrb[0].mxu0
    %v203 = vadd.f32 %v117, %v202
    %v204 = vpop.f32.mrb[0].mxu0
    %v205 = vadd.f32 %v121, %v204
    %v206 = vpop.f32.mrb[0].mxu0
    %v207 = vpop.f32.mrb[0].mxu0
    %208 = vdwg.mxu0
    %v209 = vmax.f32 %v203, 0.0
    %v210 = vmax.f32 %v205, 0.0
    %v211 = vpack.c.bf16 %v209, %v209
    %v212 = vpack.c.bf16 %v210, %v210
    %v213 = vld [vmem:[#allocation7] sm:$0xf]
    %v214 = vld [vmem:[#allocation7 + $0x4] sm:$0xf]
    %v215 = vld [vmem:[#allocation7 + $0x8] sm:$0xf]
    %v216 = vld [vmem:[#allocation7 + $0xc] sm:$0xf]
    %v217 = vld [vmem:[#allocation7 + $0x10] sm:$0xf]
    %v218 = vld [vmem:[#allocation7 + $0x14] sm:$0xf]
    %v219 = vld [vmem:[#allocation7 + $0x18] sm:$0xf]
    %v220 = vld [vmem:[#allocation7 + $0x1c] sm:$0xf]
    %v221 = vld [vmem:[#allocation7 + $0x20] sm:$0xf]
    %v222 = vld [vmem:[#allocation7 + $0x24] sm:$0xf]
    %v223 = vld [vmem:[#allocation7 + $0x28] sm:$0xf]
    %v224 = vld [vmem:[#allocation7 + $0x2c] sm:$0xf]
    %v225 = vld [vmem:[#allocation7 + $0x30] sm:$0xf]
    %v226 = vld [vmem:[#allocation7 + $0x34] sm:$0xf]
    %v227 = vld [vmem:[#allocation7 + $0x38] sm:$0xf]
    %v228 = vld [vmem:[#allocation7 + $0x3c] sm:$0xf]
    %v229 = vld [vmem:[#allocation7 + $0x40] sm:$0xf]
    %v230 = vld [vmem:[#allocation7 + $0x44] sm:$0xf]
    %v231 = vld [vmem:[#allocation7 + $0x48] sm:$0xf]
    %v232 = vld [vmem:[#allocation7 + $0x4c] sm:$0xf]
    %v233 = vld [vmem:[#allocation7 + $0x50] sm:$0xf]
    %v234 = vld [vmem:[#allocation7 + $0x54] sm:$0xf]
    %v235 = vld [vmem:[#allocation7 + $0x58] sm:$0xf]
    %v236 = vld [vmem:[#allocation7 + $0x5c] sm:$0xf]
    %v237 = vld [vmem:[#allocation7 + $0x60] sm:$0xf]
    %v238 = vld [vmem:[%s4] sm:$0x1]
    %v240 = vlaneseq
    %v241 = vshrl.u32 %v240, 7
    %v242 = vsub.s32 0, %v241
    %v243 = vrot.slane %v238, %v242
    %v270 = vunpack.c.l.b16 %v213
    %v271 = vunpack.c.l.b16 %v214
    %v272 = vunpack.c.l.b16 %v215
    %v273 = vunpack.c.l.b16 %v216
    %v274 = vunpack.c.l.b16 %v217
    %v275 = vunpack.c.l.b16 %v218
    %v276 = vunpack.c.l.b16 %v219
    %v277 = vunpack.c.l.b16 %v220
    %v278 = vunpack.c.l.b16 %v221
    %v279 = vunpack.c.l.b16 %v222
    %v280 = vunpack.c.l.b16 %v223
    %v281 = vunpack.c.l.b16 %v224
    %v282 = vunpack.c.l.b16 %v225
    %v283 = vunpack.c.l.b16 %v226
    %v284 = vunpack.c.l.b16 %v227
    %v285 = vunpack.c.l.b16 %v228
    %v286 = vunpack.c.l.b16 %v229
    %v287 = vunpack.c.l.b16 %v230
    %v288 = vunpack.c.l.b16 %v231
    %v289 = vunpack.c.l.b16 %v232
    %v290 = vunpack.c.l.b16 %v233
    %v291 = vunpack.c.l.b16 %v234
    %v292 = vunpack.c.l.b16 %v235
    %v293 = vunpack.c.l.b16 %v236
    %v294 = vunpack.c.l.b16 %v237
    %v295 = vpack.c.b16 %v271, %v270
    %v296 = vpack.c.b16 %v273, %v272
    %v297 = vpack.c.b16 %v275, %v274
    %v298 = vpack.c.b16 %v277, %v276
    %v299 = vpack.c.b16 %v279, %v278
    %v300 = vpack.c.b16 %v281, %v280
    %v301 = vpack.c.b16 %v283, %v282
    %v302 = vpack.c.b16 %v285, %v284
    %v303 = vpack.c.b16 %v287, %v286
    %v304 = vpack.c.b16 %v289, %v288
    %v305 = vpack.c.b16 %v291, %v290
    %v306 = vpack.c.b16 %v293, %v292
    %v307 = vpack.c.b16 %v294, %v294
    %vm320 = vcmask 588800
    %v322 = vsel %vm320, %v212, 0
    %vm324 = vcmask 1043456
    %v326 = vsel %vm324, %v307, 0
    %328 = vmatprep.subr.bf16.mxu0 0
    %329 = vmatpush1.bf16.msra.mxu0 %v295
    %330 = vmatprep.subr.bf16.mxu0 0
    %331 = vmatpush1.bf16.msra.mxu0 %v296
    %332 = vmatprep.subr.bf16.mxu0 0
    %333 = vmatpush1.bf16.msra.mxu0 %v297
    %334 = vmatprep.subr.bf16.mxu0 0
    %335 = vmatpush1.bf16.msra.mxu0 %v298
    %336 = vmatprep.subr.bf16.mxu0 0
    %337 = vmatpush1.bf16.msra.mxu0 %v299
    %338 = vmatprep.subr.bf16.mxu0 0
    %339 = vmatpush1.bf16.msra.mxu0 %v300
    %340 = vmatprep.subr.bf16.mxu0 0
    %341 = vmatpush1.bf16.msra.mxu0 %v301
    %342 = vmatprep.subr.bf16.mxu0 0
    %343 = vmatpush1.bf16.msra.mxu0 %v302
    %344 = vmatprep.subr.bf16.mxu0 0
    %345 = vmatpush1.bf16.msra.mxu0 %v303
    %346 = vmatprep.subr.bf16.mxu0 0
    %347 = vmatpush1.bf16.msra.mxu0 %v304
    %348 = vmatprep.subr.bf16.mxu0 0
    %349 = vmatpush1.bf16.msra.mxu0 %v305
    %350 = vmatprep.subr.bf16.mxu0 0
    %351 = vmatpush1.bf16.msra.mxu0 %v306
    %352 = vmatprep.subr.bf16.mxu0 0
    %353 = vmatpush1.bf16.msra.mxu0 %v326
    %354 = vmatprep.subr.bf16.mxu0 0
    %355 = vmatpush1.bf16.msra.mxu0 0
    %356 = vmatprep.subr.bf16.mxu0 0
    %357 = vmatpush1.bf16.msra.mxu0 0
    %358 = vmatprep.subr.bf16.mxu0 0
    %359 = vmatpush1.bf16.msra.mxu0 0
    %360 = vmatprep.mubr.bf16.mxu0 %v322
    %361 = vmatmul.mubr.bf16.gmra.mrb[0].mxu0 %v211
    %v362 = vpop.f32.mrb[0].mxu0
    %v363 = vadd.f32 %v243, %v362
    %v364 = vpop.f32.mrb[0].mxu0
    %v365 = vpop.f32.mrb[0].mxu0
    %v366 = vpop.f32.mrb[0].mxu0
    %367 = vdwg.mxu0
    %v368 = vmax.f32 %v363, 0.0
    %v369 = vpack.c.bf16 %v368, %v368
    %v370 = vld [vmem:[#allocation8] sm:$0xf]
    %v371 = vld [vmem:[#allocation8 + $0x4] sm:$0xf]
    %v372 = vld [vmem:[#allocation8 + $0x8] sm:$0xf]
    %v373 = vld [vmem:[#allocation8 + $0xc] sm:$0xf]
    %v374 = vld [vmem:[#allocation8 + $0x10] sm:$0xf]
    %v375 = vld [vmem:[#allocation8 + $0x14] sm:$0xf]
    %v376 = vld [vmem:[#allocation8 + $0x18] sm:$0xf]
    %v377 = vld [vmem:[#allocation8 + $0x1c] sm:$0xf]
    %v378 = vld [vmem:[#allocation8 + $0x20] sm:$0xf]
    %v379 = vld [vmem:[#allocation8 + $0x24] sm:$0xf]
    %v380 = vld [vmem:[#allocation8 + $0x28] sm:$0xf]
    %v381 = vld [vmem:[#allocation8 + $0x2c] sm:$0xf]
    %v382 = vld [vmem:[#allocation8 + $0x30] sm:$0x3]
    %v383 = vld [vmem:[%s6] sm:$0x1]
    %v385 = vlaneseq
    %v386 = vshrl.u32 %v385, 7
    %v387 = vsub.s32 0, %v386
    %v388 = vrot.slane %v383, %v387
    %v403 = vunpack.c.l.b16 %v370
    %v404 = vunpack.c.l.b16 %v371
    %v405 = vunpack.c.l.b16 %v372
    %v406 = vunpack.c.l.b16 %v373
    %v407 = vunpack.c.l.b16 %v374
    %v408 = vunpack.c.l.b16 %v375
    %v409 = vunpack.c.l.b16 %v376
    %v410 = vunpack.c.l.b16 %v377
    %v411 = vunpack.c.l.b16 %v378
    %v412 = vunpack.c.l.b16 %v379
    %v413 = vunpack.c.l.b16 %v380
    %v414 = vunpack.c.l.b16 %v381
    %v415 = vunpack.c.l.b16 %v382
    %v416 = vpack.c.b16 %v404, %v403
    %v417 = vpack.c.b16 %v406, %v405
    %v418 = vpack.c.b16 %v408, %v407
    %v419 = vpack.c.b16 %v410, %v409
    %v420 = vpack.c.b16 %v412, %v411
    %v421 = vpack.c.b16 %v414, %v413
    %v422 = vpack.c.b16 %v415, %v415
    %vm429 = vcmask 818176
    %v431 = vsel %vm429, %v369, 0
    %vm433 = vcmask 1041408
    %v435 = vsel %vm433, %v422, 0
    %437 = vmatprep.subr.bf16.mxu0 0
    %438 = vmatpush1.bf16.msra.mxu0 %v416
    %439 = vmatprep.subr.bf16.mxu0 0
    %440 = vmatpush1.bf16.msra.mxu0 %v417
    %441 = vmatprep.subr.bf16.mxu0 0
    %442 = vmatpush1.bf16.msra.mxu0 %v418
    %443 = vmatprep.subr.bf16.mxu0 0
    %444 = vmatpush1.bf16.msra.mxu0 %v419
    %445 = vmatprep.subr.bf16.mxu0 0
    %446 = vmatpush1.bf16.msra.mxu0 %v420
    %447 = vmatprep.subr.bf16.mxu0 0
    %448 = vmatpush1.bf16.msra.mxu0 %v421
    %449 = vmatprep.subr.bf16.mxu0 0
    %450 = vmatpush1.bf16.msra.mxu0 %v435
    %451 = vmatprep.subr.bf16.mxu0 0
    %452 = vmatpush1.bf16.msra.mxu0 0
    %453 = vmatprep.subr.bf16.mxu0 0
    %454 = vmatpush1.bf16.msra.mxu0 0
    %455 = vmatprep.subr.bf16.mxu0 0
    %456 = vmatpush1.bf16.msra.mxu0 0
    %457 = vmatprep.subr.bf16.mxu0 0
    %458 = vmatpush1.bf16.msra.mxu0 0
    %459 = vmatprep.subr.bf16.mxu0 0
    %460 = vmatpush1.bf16.msra.mxu0 0
    %461 = vmatprep.subr.bf16.mxu0 0
    %462 = vmatpush1.bf16.msra.mxu0 0
    %463 = vmatprep.subr.bf16.mxu0 0
    %464 = vmatpush1.bf16.msra.mxu0 0
    %465 = vmatprep.subr.bf16.mxu0 0
    %466 = vmatpush1.bf16.msra.mxu0 0
    %467 = vmatprep.subr.bf16.mxu0 0
    %468 = vmatpush1.bf16.msra.mxu0 0
    %469 = vmatprep.mubr.bf16.mxu0 0
    %470 = vmatmul.mubr.bf16.gmra.mrb[0].mxu0 %v431
    %v471 = vpop.f32.mrb[0].mxu0
    %v472 = vadd.f32 %v388, %v471
    %v473 = vpop.f32.mrb[0].mxu0
    %v474 = vpop.f32.mrb[0].mxu0
    %v475 = vpop.f32.mrb[0].mxu0
    %476 = vdwg.mxu0
    %v477 = vmax.f32 %v472, 0.0
    %478 = vst [vmem:[#allocation12] sm:$0xff] %v477
    %v479 = vpack.c.bf16 %v477, %v477
    %v480 = vld [vmem:[#allocation10] sm:$0xf]
    %v481 = vld [vmem:[#allocation10 + $0x4] sm:$0xf]
    %v482 = vld [vmem:[#allocation10 + $0x8] sm:$0xf]
    %v483 = vld [vmem:[#allocation10 + $0xc] sm:$0xf]
    %v484 = vld [vmem:[#allocation10 + $0x10] sm:$0xf]
    %v485 = vld [vmem:[#allocation10 + $0x14] sm:$0xf]
    %v486 = vld [vmem:[#allocation10 + $0x18] sm:$0xf]
    %v487 = vld [vmem:[#allocation10 + $0x1c] sm:$0xf]
    %v488 = vld [vmem:[#allocation10 + $0x20] sm:$0xf]
    %v489 = vld [vmem:[#allocation10 + $0x24] sm:$0xf]
    %v490 = vld [vmem:[#allocation10 + $0x28] sm:$0xf]
    %v491 = vld [vmem:[#allocation10 + $0x2c] sm:$0xf]
    %v492 = vld [vmem:[#allocation10 + $0x30] sm:$0xf]
    %v493 = vld [vmem:[#allocation10 + $0x34] sm:$0xf]
    %v494 = vld [vmem:[#allocation10 + $0x38] sm:$0xf]
    %v495 = vld [vmem:[#allocation10 + $0x3c] sm:$0xf]
    %v496 = vld [vmem:[%s8] sm:$0x1]
    %v498 = vlaneseq
    %v499 = vshrl.u32 %v498, 7
    %v500 = vsub.s32 0, %v499
    %v501 = vrot.slane %v496, %v500
    %v519 = vunpack.c.l.b16 %v480
    %v520 = vunpack.c.l.b16 %v481
    %v521 = vunpack.c.l.b16 %v482
    %v522 = vunpack.c.l.b16 %v483
    %v523 = vunpack.c.l.b16 %v484
    %v524 = vunpack.c.l.b16 %v485
    %v525 = vunpack.c.l.b16 %v486
    %v526 = vunpack.c.l.b16 %v487
    %v527 = vunpack.c.l.b16 %v488
    %v528 = vunpack.c.l.b16 %v489
    %v529 = vunpack.c.l.b16 %v490
    %v530 = vunpack.c.l.b16 %v491
    %v531 = vunpack.c.l.b16 %v492
    %v532 = vunpack.c.l.b16 %v493
    %v533 = vunpack.c.l.b16 %v494
    %v534 = vunpack.c.l.b16 %v495
    %v535 = vpack.c.b16 %v520, %v519
    %v536 = vpack.c.b16 %v522, %v521
    %v537 = vpack.c.b16 %v524, %v523
    %v538 = vpack.c.b16 %v526, %v525
    %v539 = vpack.c.b16 %v528, %v527
    %v540 = vpack.c.b16 %v530, %v529
    %v541 = vpack.c.b16 %v532, %v531
    %v542 = vpack.c.b16 %v534, %v533
    %551 = vmatprep.subr.bf16.mxu0 0
    %552 = vmatpush1.bf16.msra.mxu0 %v535
    %553 = vmatprep.subr.bf16.mxu0 0
    %554 = vmatpush1.bf16.msra.mxu0 %v536
    %555 = vmatprep.subr.bf16.mxu0 0
    %556 = vmatpush1.bf16.msra.mxu0 %v537
    %557 = vmatprep.subr.bf16.mxu0 0
    %558 = vmatpush1.bf16.msra.mxu0 %v538
    %559 = vmatprep.subr.bf16.mxu0 0
    %560 = vmatpush1.bf16.msra.mxu0 %v539
    %561 = vmatprep.subr.bf16.mxu0 0
    %562 = vmatpush1.bf16.msra.mxu0 %v540
    %563 = vmatprep.subr.bf16.mxu0 0
    %564 = vmatpush1.bf16.msra.mxu0 %v541
    %565 = vmatprep.subr.bf16.mxu0 0
    %566 = vmatpush1.bf16.msra.mxu0 %v542
    %567 = vmatprep.subr.bf16.mxu0 0
    %568 = vmatpush1.bf16.msra.mxu0 0
    %569 = vmatprep.subr.bf16.mxu0 0
    %570 = vmatpush1.bf16.msra.mxu0 0
    %571 = vmatprep.subr.bf16.mxu0 0
    %572 = vmatpush1.bf16.msra.mxu0 0
    %573 = vmatprep.subr.bf16.mxu0 0
    %574 = vmatpush1.bf16.msra.mxu0 0
    %575 = vmatprep.subr.bf16.mxu0 0
    %576 = vmatpush1.bf16.msra.mxu0 0
    %577 = vmatprep.subr.bf16.mxu0 0
    %578 = vmatpush1.bf16.msra.mxu0 0
    %579 = vmatprep.subr.bf16.mxu0 0
    %580 = vmatpush1.bf16.msra.mxu0 0
    %581 = vmatprep.subr.bf16.mxu0 0
    %582 = vmatpush1.bf16.msra.mxu0 0
    %583 = vmatprep.mubr.bf16.mxu0 0
    %584 = vmatmul.mubr.bf16.gmra.mrb[0].mxu0 %v479
    %v585 = vpop.f32.mrb[0].mxu0
    %v586 = vadd.f32 %v501, %v585
    %v587 = vpop.f32.mrb[0].mxu0
    %v588 = vpop.f32.mrb[0].mxu0
    %v589 = vpop.f32.mrb[0].mxu0
    %590 = vdwg.mxu0
    %591 = vst [vmem:[#allocation11] sm:$0xff] %v586
    // Predicated region
    $region58: #{tpu_custom_call.1} parent=1 // pred_check
      _
    $region59: #{tpu_custom_call.1} parent=1 // pred_check_branch
      %593 = sbr.rel (0) target = $region61
    $region60: #{tpu_custom_call.1} parent=1 // pred_region
      %s595 = ssub.s32 128, 128
      %596 = vsyncadd [#allocation4], %s595
      %s598 = sshll.u32 [#allocation11], 4
      %s599 = int_to_ptr.vmem [resolvable:$true] %s598
      %601 = dma.vmem_to_hbm [thread:$0]  %s599, 128, %s9, [#allocation4]
    $region61: #{tpu_custom_call.1} parent=1 // pred_fallthru
      _
    // Predicated region
    $region62: #{tpu_custom_call.1} parent=1 // pred_check
      _
    $region63: #{tpu_custom_call.1} parent=1 // pred_check_branch
      %603 = sbr.rel (0) target = $region65
    $region64: #{tpu_custom_call.1} parent=1 // pred_region
      %s605 = ssub.s32 128, 128
      %606 = vsyncadd [#allocation13], %s605
      %s608 = sshll.u32 [#allocation12], 4
      %s609 = int_to_ptr.vmem [resolvable:$true] %s608
      %611 = dma.vmem_to_hbm [thread:$0]  %s609, 128, %s10, [#allocation13]
    $region65: #{tpu_custom_call.1} parent=1 // pred_fallthru
      _
    // Predicated region
    $region66: #{tpu_custom_call.1} parent=1 // pred_check
      _
    $region67: #{tpu_custom_call.1} parent=1 // pred_check_branch
      %613 = sbr.rel (0) target = $region69
    $region68: #{tpu_custom_call.1} parent=1 // pred_region
      %614 = dma.done [#allocation4], 128
    $region69: #{tpu_custom_call.1} parent=1 // pred_fallthru
      _
    // Predicated region
    $region70: #{tpu_custom_call.1} parent=1 // pred_check
      _
    $region71: #{tpu_custom_call.1} parent=1 // pred_check_branch
      %616 = sbr.rel (0) target = $region73
    $region72: #{tpu_custom_call.1} parent=1 // pred_region
      %617 = dma.done [#allocation13], 128
    $region73: #{tpu_custom_call.1} parent=1 // pred_fallthru
      _
    %618 = vsyncpa [#allocation3], 1
    %619 = vsyncpa [#allocation6], 1
    %620 = vsyncpa [#allocation9], 1
    %621 = vsyncpa [#allocation4], 1
    %622 = vsyncpa [#allocation13], 1

</llo_original>
